<compile_context>
chip_gen: v6e
topology: v6e:2x2x1
jax: 0.10.0
libtpu: 0.0.40
codegen_flags: <defaults>
</compile_context>

<pallas_src>
import functools

import jax
import jax.numpy as jnp
from jax.experimental import pallas as pl
from jax.experimental.pallas import tpu as pltpu


def _round_up(x, m):
    return ((x + m - 1) // m) * m


def _cdiv(a, b):
    return (a + b - 1) // b


# ----------------------------- Pallas kernel ------------------------------- #

def _sdgnn_fused_kernel(a_ref, x_ref, xd_ref, wg_ref, bg_ref, wl_ref, bl_ref,
                        og_ref, ol_ref):
    """Grid = (row_tiles,).  X / W_g / W_l / biases stay VMEM-resident.

    enc_global: relu((A_strip @ X) @ W_g + b_g)   (mean neighbor agg + linear)
    enc_local : relu(Xd_tile @ W_l + b_l)
    """
    # Neighbor mean-aggregation over the FULL contraction axis in one matmul,
    # f32 MXU accumulation; no scratch / no pl.when needed.
    agg = jnp.dot(a_ref[...], x_ref[...], preferred_element_type=jnp.float32)
    hg = jnp.dot(agg.astype(wg_ref.dtype), wg_ref[...],
                 preferred_element_type=jnp.float32)
    og_ref[...] = jnp.maximum(hg + bg_ref[...], 0.0)

    hl = jnp.dot(xd_ref[...], wl_ref[...], preferred_element_type=jnp.float32)
    ol_ref[...] = jnp.maximum(hl + bl_ref[...], 0.0)


# ------------------------------ wrapper ------------------------------------ #

def _vmem_footprint_bytes(tile_m, n, f, e):
    """Approximate VMEM working set of the kernel at a given row tile."""
    bf, fl = 2, 4
    a_strip = 2 * tile_m * n * bf        # A row strip, double-buffered
    x_res = n * f * bf                   # resident X (block index constant)
    xd = 2 * tile_m * f * bf             # drug-feature row tile, double-buffered
    w = 2 * f * e * bf                   # W_g + W_l (resident)
    b = 2 * e * fl                       # b_g + b_l
    outs = 2 * 2 * tile_m * e * fl       # two f32 outputs, double-buffered
    return a_strip + x_res + xd + w + b + outs


def sdgnn_forward(params, a_norm, local_features, drug_features, *,
                  tile_m=512, compute_dtype=jnp.bfloat16,
                  vmem_budget_bytes=40 * 1024 * 1024):
    """SDGNN.forward: returns (embeds_global, embeds_local), both [N, E] f32."""
    n, f = local_features.shape
    e = params["w_g"].shape[1]
    assert a_norm.shape == (n, n)
    assert drug_features.shape == (n, f)

    # --- row-tile selection -------------------------------------------------
    tile_m = min(tile_m, _round_up(n, 8))          # small graphs: shrink tile
    # Shrink the row tile until the resident-X working set fits the budget.
    while tile_m > 256 and _vmem_footprint_bytes(tile_m, n, f, e) > vmem_budget_bytes:
        tile_m //= 2
    tile_m = max(8, _round_up(tile_m, 8))
    # Keep >= 2 row tiles when the graph is big enough so v7x's two
    # TensorCores can both be used via dimension_semantics=("parallel",).
    if n > 512 and _cdiv(n, tile_m) < 2:
        tile_m = _round_up(_cdiv(n, 2), 8)
    # TODO(synk): for graphs where even the resident X exceeds the VMEM budget,
    # re-introduce a K (contraction) grid axis with an f32 accumulator.

    num_row_tiles = _cdiv(n, tile_m)

    # bf16 inputs, f32 MXU accumulation.  A is cast only if the producer did
    # not already supply the compute dtype (avoids an extra HBM pass over N^2).
    a = a_norm if a_norm.dtype == compute_dtype else a_norm.astype(compute_dtype)
    x = local_features.astype(compute_dtype)
    xd = drug_features.astype(compute_dtype)
    wg = params["w_g"].astype(compute_dtype)
    wl = params["w_l"].astype(compute_dtype)
    bg = params["b_g"].astype(jnp.float32)
    bl = params["b_l"].astype(jnp.float32)

    # Generation-safe VMEM limit: real footprint with 2x headroom, capped well
    # below v7x's 64 MiB physical per-TC VMEM.
    vmem_limit = int(min(max(2 * _vmem_footprint_bytes(tile_m, n, f, e),
                             16 * 1024 * 1024),
                         48 * 1024 * 1024))

    flops = 2 * n * n * f + 2 * n * f * e + 2 * n * f * e
    bytes_accessed = (n * n * 2          # A (bf16)
                      + 2 * n * f * 2    # X + X_drug (bf16)
                      + 2 * f * e * 2    # W_g + W_l
                      + 2 * n * e * 4)   # two f32 outputs
    cost = pl.CostEstimate(flops=int(flops), transcendentals=0,
                           bytes_accessed=int(bytes_accessed))

    out_g, out_l = pl.pallas_call(
        _sdgnn_fused_kernel,
        out_shape=(jax.ShapeDtypeStruct((n, e), jnp.float32),
                   jax.ShapeDtypeStruct((n, e), jnp.float32)),
        grid_spec=pltpu.PrefetchScalarGridSpec(
            num_scalar_prefetch=0,
            grid=(num_row_tiles,),
            in_specs=[
                pl.BlockSpec((tile_m, n), lambda i: (i, 0)),  # A row strip
                pl.BlockSpec((n, f), lambda i: (0, 0)),       # X (resident)
                pl.BlockSpec((tile_m, f), lambda i: (i, 0)),  # drug-feature tile
                pl.BlockSpec((f, e), lambda i: (0, 0)),       # W_g (resident)
                pl.BlockSpec((1, e), lambda i: (0, 0)),       # b_g
                pl.BlockSpec((f, e), lambda i: (0, 0)),       # W_l (resident)
                pl.BlockSpec((1, e), lambda i: (0, 0)),       # b_l
            ],
            out_specs=[
                pl.BlockSpec((tile_m, e), lambda i: (i, 0)),  # embeds_global
                pl.BlockSpec((tile_m, e), lambda i: (i, 0)),  # embeds_local
            ],
        ),
        compiler_params=pltpu.CompilerParams(
            dimension_semantics=("parallel",),
            vmem_limit_bytes=vmem_limit),
        cost_estimate=cost,
    )(a, x, xd, wg, bg, wl, bl)

    return out_g, out_l


# --------------------------- parameter init -------------------------------- #

def init_params(key, f_dim, emb_dim):
    ks = jax.random.split(key, 8)
    scale_g = 1.0 / jnp.sqrt(f_dim)
    scale_e = 1.0 / jnp.sqrt(emb_dim)
    params = {
        # synthetic enc_global / enc_local encoder weights
        "w_g": jax.random.normal(ks[0], (f_dim, emb_dim), jnp.float32) * scale_g,
        "b_g": jnp.zeros((1, emb_dim), jnp.float32),
        "w_l": jax.random.normal(ks[1], (f_dim, emb_dim), jnp.float32) * scale_g,
        "b_l": jnp.zeros((1, emb_dim), jnp.float32),
        # SDGNN.__init__ parameters (used only in loss(), kept for parity)
        "score1_w": jax.random.normal(ks[2], (emb_dim, 1), jnp.float32) * scale_e,
        "score1_b": jnp.zeros((1,), jnp.float32),
        "score2_w": jax.random.normal(ks[3], (emb_dim, 1), jnp.float32) * scale_e,
        "score2_b": jnp.zeros((1,), jnp.float32),
        "fc_w": jax.random.normal(ks[4], (2 * emb_dim, 1), jnp.float32) * scale_e,
        "fc_b": jnp.zeros((1,), jnp.float32),
    }
    return params


# --------------------------------- main ------------------------------------ #

if __name__ == "__main__":
    N_NODES = 16          # number of graph nodes (small demo size)
    F_DIM = 128           # feature dimension (args.f_dim)
    EMB_DIM = 128         # embedding dimension (args.emb_dim)
    LOADER_BATCH = 8      # logical data_loader batch size; the Pallas row tile is
                          # independent of it (cat(dim=0) == row stacking).

    key = jax.random.PRNGKey(0)
    k_feat, k_drug, k_adj, k_par = jax.random.split(key, 4)

    # node-level local features fed to enc_global
    local_features = jax.random.normal(k_feat, (N_NODES, F_DIM), jnp.float32)
    # per-drug features fed batch-wise to enc_local (stand-in for the loader's graphs)
    drug_features = jax.random.normal(k_drug, (N_NODES, F_DIM), jnp.float32)

    # row-normalized dense adjacency with self loops (mean aggregator).
    adj_logits = jax.random.uniform(k_adj, (N_NODES, N_NODES))
    adj = (adj_logits > 0.7).astype(jnp.float32) + jnp.eye(N_NODES, dtype=jnp.float32)
    a_norm_f32 = adj / jnp.sum(adj, axis=1, keepdims=True)
    # Fold the compute-dtype cast into the producer of A (no wrapper-side HBM pass).
    a_norm = a_norm_f32.astype(jnp.bfloat16)

    params = init_params(k_par, F_DIM, EMB_DIM)

    fwd = jax.jit(functools.partial(sdgnn_forward, tile_m=512))
    embeds_global, embeds_local = fwd(params, a_norm, local_features, drug_features)
    jax.block_until_ready((embeds_global, embeds_local))

    # sanity check against plain-JAX f32 reference (bf16 inputs -> loose tolerance)
    ref_global = jnp.maximum(
        (a_norm_f32 @ local_features) @ params["w_g"] + params["b_g"], 0.0)
    ref_local = jnp.maximum(drug_features @ params["w_l"] + params["b_l"], 0.0)
    assert embeds_global.shape == (N_NODES, EMB_DIM)
    assert embeds_local.shape == (N_NODES, EMB_DIM)
    assert jnp.allclose(embeds_global, ref_global, atol=5e-2, rtol=5e-2)
    assert jnp.allclose(embeds_local, ref_local, atol=5e-2, rtol=5e-2)

    print("KERNEL_OK")
</pallas_src>

<mosaic_0001>
module attributes {stable_mosaic.version = 11 : i64} {
  func.func @_sdgnn_fused_kernel(%arg0: i32, %arg1: memref<16x16xbf16, #tpu.memory_space<vmem>>, %arg2: memref<16x128xbf16, #tpu.memory_space<vmem>>, %arg3: memref<16x128xbf16, #tpu.memory_space<vmem>>, %arg4: memref<128x128xbf16, #tpu.memory_space<vmem>>, %arg5: memref<1x128xf32, #tpu.memory_space<vmem>>, %arg6: memref<128x128xbf16, #tpu.memory_space<vmem>>, %arg7: memref<1x128xf32, #tpu.memory_space<vmem>>, %arg8: memref<16x128xf32, #tpu.memory_space<vmem>>, %arg9: memref<16x128xf32, #tpu.memory_space<vmem>>) attributes {dimension_semantics = [#tpu.dimension_semantics<parallel>], iteration_bounds = array<i64: 1>, scalar_prefetch = 0 : i64, scratch_operands = 0 : i64, tpu.core_type = #tpu.core_type<tc>, window_params = [{transform_indices = @transform_0, window_bounds = array<i64: 16, 16>}, {pipeline_mode = #tpu.pipeline_mode<synchronous>, transform_indices = @transform_1, window_bounds = array<i64: 16, 128>}, {transform_indices = @transform_2, window_bounds = array<i64: 16, 128>}, {pipeline_mode = #tpu.pipeline_mode<synchronous>, transform_indices = @transform_3, window_bounds = array<i64: 128, 128>}, {pipeline_mode = #tpu.pipeline_mode<synchronous>, transform_indices = @transform_4, window_bounds = array<i64: 1, 128>}, {pipeline_mode = #tpu.pipeline_mode<synchronous>, transform_indices = @transform_5, window_bounds = array<i64: 128, 128>}, {pipeline_mode = #tpu.pipeline_mode<synchronous>, transform_indices = @transform_6, window_bounds = array<i64: 1, 128>}, {transform_indices = @transform_7, window_bounds = array<i64: 16, 128>}, {transform_indices = @transform_8, window_bounds = array<i64: 16, 128>}]} {
    %c0 = arith.constant 0 : index
    %c0_0 = arith.constant 0 : index
    %0 = vector.load %arg1[%c0, %c0_0] : memref<16x16xbf16, #tpu.memory_space<vmem>>, vector<16x16xbf16>
    %c0_1 = arith.constant 0 : index
    %c0_2 = arith.constant 0 : index
    %1 = vector.load %arg2[%c0_1, %c0_2] : memref<16x128xbf16, #tpu.memory_space<vmem>>, vector<16x128xbf16>
    %cst = arith.constant dense<0.000000e+00> : vector<16x128xf32>
    %2 = tpu.matmul %0, %1, %cst {dimension_numbers = #tpu.dot_dimension_numbers<[1], [0], [0], [1], [0, 0, 1, 1], [], []>} : vector<16x16xbf16>, vector<16x128xbf16>, vector<16x128xf32> -> vector<16x128xf32>
    %3 = arith.truncf %2 : vector<16x128xf32> to vector<16x128xbf16>
    %c0_3 = arith.constant 0 : index
    %c0_4 = arith.constant 0 : index
    %4 = vector.load %arg4[%c0_3, %c0_4] : memref<128x128xbf16, #tpu.memory_space<vmem>>, vector<128x128xbf16>
    %cst_5 = arith.constant dense<0.000000e+00> : vector<16x128xf32>
    %5 = tpu.matmul %3, %4, %cst_5 {dimension_numbers = #tpu.dot_dimension_numbers<[1], [0], [0], [1], [0, 0, 1, 1], [], []>} : vector<16x128xbf16>, vector<128x128xbf16>, vector<16x128xf32> -> vector<16x128xf32>
    %c0_6 = arith.constant 0 : index
    %c0_7 = arith.constant 0 : index
    %6 = vector.load %arg5[%c0_6, %c0_7] : memref<1x128xf32, #tpu.memory_space<vmem>>, vector<1x128xf32>
    %7 = vector.broadcast %6 : vector<1x128xf32> to vector<16x128xf32>
    %8 = arith.addf %5, %7 : vector<16x128xf32>
    %cst_8 = arith.constant 0.000000e+00 : f32
    %9 = vector.broadcast %cst_8 : f32 to vector<16x128xf32>
    %10 = arith.maximumf %8, %9 : vector<16x128xf32>
    %c0_9 = arith.constant 0 : index
    %c0_10 = arith.constant 0 : index
    %11 = vector.load %arg8[%c0_9, %c0_10] : memref<16x128xf32, #tpu.memory_space<vmem>>, vector<16x128xf32>
    tpu.vector_store %arg8[%c0_9, %c0_10], %10 {strides = array<i32>} : memref<16x128xf32, #tpu.memory_space<vmem>>, vector<16x128xf32>,
    %c0_11 = arith.constant 0 : index
    %c0_12 = arith.constant 0 : index
    %12 = vector.load %arg3[%c0_11, %c0_12] : memref<16x128xbf16, #tpu.memory_space<vmem>>, vector<16x128xbf16>
    %c0_13 = arith.constant 0 : index
    %c0_14 = arith.constant 0 : index
    %13 = vector.load %arg6[%c0_13, %c0_14] : memref<128x128xbf16, #tpu.memory_space<vmem>>, vector<128x128xbf16>
    %cst_15 = arith.constant dense<0.000000e+00> : vector<16x128xf32>
    %14 = tpu.matmul %12, %13, %cst_15 {dimension_numbers = #tpu.dot_dimension_numbers<[1], [0], [0], [1], [0, 0, 1, 1], [], []>} : vector<16x128xbf16>, vector<128x128xbf16>, vector<16x128xf32> -> vector<16x128xf32>
    %c0_16 = arith.constant 0 : index
    %c0_17 = arith.constant 0 : index
    %15 = vector.load %arg7[%c0_16, %c0_17] : memref<1x128xf32, #tpu.memory_space<vmem>>, vector<1x128xf32>
    %16 = vector.broadcast %15 : vector<1x128xf32> to vector<16x128xf32>
    %17 = arith.addf %14, %16 : vector<16x128xf32>
    %cst_18 = arith.constant 0.000000e+00 : f32
    %18 = vector.broadcast %cst_18 : f32 to vector<16x128xf32>
    %19 = arith.maximumf %17, %18 : vector<16x128xf32>
    %c0_19 = arith.constant 0 : index
    %c0_20 = arith.constant 0 : index
    %20 = vector.load %arg9[%c0_19, %c0_20] : memref<16x128xf32, #tpu.memory_space<vmem>>, vector<16x128xf32>
    tpu.vector_store %arg9[%c0_19, %c0_20], %19 {strides = array<i32>} : memref<16x128xf32, #tpu.memory_space<vmem>>, vector<16x128xf32>,
    return
  }
  func.func @transform_0(%arg0: i32) -> (i32, i32) {
    %c0_i32 = arith.constant 0 : i32
    %c0_i32_0 = arith.constant 0 : i32
    return %arg0, %c0_i32 : i32, i32
  }
  func.func @transform_1(%arg0: i32) -> (i32, i32) {
    %c0_i32 = arith.constant 0 : i32
    %c0_i32_0 = arith.constant 0 : i32
    %c0_i32_1 = arith.constant 0 : i32
    return %c0_i32, %c0_i32_0 : i32, i32
  }
  func.func @transform_2(%arg0: i32) -> (i32, i32) {
    %c0_i32 = arith.constant 0 : i32
    %c0_i32_0 = arith.constant 0 : i32
    return %arg0, %c0_i32 : i32, i32
  }
  func.func @transform_3(%arg0: i32) -> (i32, i32) {
    %c0_i32 = arith.constant 0 : i32
    %c0_i32_0 = arith.constant 0 : i32
    %c0_i32_1 = arith.constant 0 : i32
    return %c0_i32, %c0_i32_0 : i32, i32
  }
  func.func @transform_4(%arg0: i32) -> (i32, i32) {
    %c0_i32 = arith.constant 0 : i32
    %c0_i32_0 = arith.constant 0 : i32
    %c0_i32_1 = arith.constant 0 : i32
    return %c0_i32, %c0_i32_0 : i32, i32
  }
  func.func @transform_5(%arg0: i32) -> (i32, i32) {
    %c0_i32 = arith.constant 0 : i32
    %c0_i32_0 = arith.constant 0 : i32
    %c0_i32_1 = arith.constant 0 : i32
    return %c0_i32, %c0_i32_0 : i32, i32
  }
  func.func @transform_6(%arg0: i32) -> (i32, i32) {
    %c0_i32 = arith.constant 0 : i32
    %c0_i32_0 = arith.constant 0 : i32
    %c0_i32_1 = arith.constant 0 : i32
    return %c0_i32, %c0_i32_0 : i32, i32
  }
  func.func @transform_7(%arg0: i32) -> (i32, i32) {
    %c0_i32 = arith.constant 0 : i32
    %c0_i32_0 = arith.constant 0 : i32
    return %arg0, %c0_i32 : i32, i32
  }
  func.func @transform_8(%arg0: i32) -> (i32, i32) {
    %c0_i32 = arith.constant 0 : i32
    %c0_i32_0 = arith.constant 0 : i32
    return %arg0, %c0_i32 : i32, i32
  }
}

</mosaic_0001>

<llo_original>
// kernel: sdgnn_forward.1
$region0: #{sdgnn_forward.1}
  #allocation0 [shape = 'u32[]', space=smem, size = 0x4, offset = 0x4, fixed_abs, tag = 'smem constant byte address 0x4 - core index']
  #allocation1 [shape = 'u32[144,128]{1,0:T(1,128)}', space=vmem, size = 0x12000, scoped, tag = 'internal scratch']
  %s0 = inlined_call_operand.vmem [shape: bf16[16,16], index: 0, kind: input, shape index: {}]
  %s1 = inlined_call_operand.vmem [shape: bf16[16,128], index: 1, kind: input, shape index: {}]
  %s2 = inlined_call_operand.vmem [shape: bf16[16,128], index: 2, kind: input, shape index: {}]
  %s3 = inlined_call_operand.vmem [shape: bf16[128,128], index: 3, kind: input, shape index: {}]
  %s4 = inlined_call_operand.vmem [shape: f32[1,128], index: 4, kind: input, shape index: {}]
  %s5 = inlined_call_operand.vmem [shape: bf16[128,128], index: 5, kind: input, shape index: {}]
  %s6 = inlined_call_operand.vmem [shape: f32[1,128], index: 6, kind: input, shape index: {}]
  %s7 = inlined_call_operand.hbm [shape: f32[16,128], index: 7, kind: output, shape index: {0}]
  %s8 = inlined_call_operand.hbm [shape: f32[16,128], index: 8, kind: output, shape index: {1}]
  %9 = xla_tuple %s7, %s8
  %s10 = sld [smem:[#allocation0]]
  $region46: #{sdgnn_forward.1} parent=0
    _
  %s12 = ssub.s32 1, %s10
  %s13 = scalar_select 0, %s12, %s10
  $region1: #{sdgnn_forward.1} parent=0
    #allocation2 [shape = 'u8[8192]{0}', space=vmem, size = 0x2000, scoped, tag = 'output window, operand 0, single buffered']
    #allocation3 [shape = 's32[1]{0}', space=sflag, size = 0x4, scoped, tag = 'scoped memory for sdgnn_forward.1']
    #allocation4 [shape = 'u8[8192]{0}', space=vmem, size = 0x2000, scoped, tag = 'output window, operand 1, single buffered']
    #allocation5 [shape = 's32[1]{0}', space=sflag, size = 0x4, scoped, tag = 'scoped memory for sdgnn_forward.1']
    %14 = vsyncpa [#allocation3], 0
    %15 = vsyncpa [#allocation5], 0
    // Predicated region
    $region2: #{sdgnn_forward.1} parent=1 // pred_check
      _
    $region3: #{sdgnn_forward.1} parent=1 // pred_check_branch
      %17 = sbr.rel (0) target = $region5
    $region4: #{sdgnn_forward.1} parent=1 // pred_region
      _
    $region5: #{sdgnn_forward.1} parent=1 // pred_fallthru
      _
    // Predicated region
    $region6: #{sdgnn_forward.1} parent=1 // pred_check
      _
    $region7: #{sdgnn_forward.1} parent=1 // pred_check_branch
      %19 = sbr.rel (0) target = $region9
    $region8: #{sdgnn_forward.1} parent=1 // pred_region
      _
    $region9: #{sdgnn_forward.1} parent=1 // pred_fallthru
      _
    // Predicated region
    $region10: #{sdgnn_forward.1} parent=1 // pred_check
      _
    $region11: #{sdgnn_forward.1} parent=1 // pred_check_branch
      %21 = sbr.rel (0) target = $region13
    $region12: #{sdgnn_forward.1} parent=1 // pred_region
      _
    $region13: #{sdgnn_forward.1} parent=1 // pred_fallthru
      _
    // Predicated region
    $region14: #{sdgnn_forward.1} parent=1 // pred_check
      _
    $region15: #{sdgnn_forward.1} parent=1 // pred_check_branch
      %23 = sbr.rel (0) target = $region17
    $region16: #{sdgnn_forward.1} parent=1 // pred_region
      _
    $region17: #{sdgnn_forward.1} parent=1 // pred_fallthru
      _
    // Predicated region
    $region18: #{sdgnn_forward.1} parent=1 // pred_check
      _
    $region19: #{sdgnn_forward.1} parent=1 // pred_check_branch
      %25 = sbr.rel (0) target = $region21
    $region20: #{sdgnn_forward.1} parent=1 // pred_region
      _
    $region21: #{sdgnn_forward.1} parent=1 // pred_fallthru
      _
    // Predicated region
    $region22: #{sdgnn_forward.1} parent=1 // pred_check
      _
    $region23: #{sdgnn_forward.1} parent=1 // pred_check_branch
      %27 = sbr.rel (0) target = $region25
    $region24: #{sdgnn_forward.1} parent=1 // pred_region
      _
    $region25: #{sdgnn_forward.1} parent=1 // pred_fallthru
      _
    // Predicated region
    $region26: #{sdgnn_forward.1} parent=1 // pred_check
      _
    $region27: #{sdgnn_forward.1} parent=1 // pred_check_branch
      %29 = sbr.rel (0) target = $region29
    $region28: #{sdgnn_forward.1} parent=1 // pred_region
      _
    $region29: #{sdgnn_forward.1} parent=1 // pred_fallthru
      _
    %v31 = vld [vmem:[%s0] sm:$0xf]
    %v32 = vld [vmem:[%s0 + $0x4] sm:$0xf]
    %v33 = vld [vmem:[%s1] sm:$0xf]
    %v34 = vld [vmem:[%s1 + $0x4] sm:$0xf]
    %v37 = vunpack.c.l.b16 %v31
    %v38 = vunpack.c.l.b16 %v32
    %v39 = vpack.c.b16 %v38, %v37
    %v42 = vunpack.c.l.b16 %v33
    %v43 = vunpack.c.l.b16 %v34
    %v44 = vpack.c.b16 %v43, %v42
    %vm46 = vcmask 130048
    %v48 = vsel %vm46, %v39, 0
    %50 = vmatprep.subr.bf16.mxu0 0
    %51 = vmatpush1.bf16.msra.mxu0 0
    %52 = vmatprep.subr.bf16.mxu0 0
    %53 = vmatpush1.bf16.msra.mxu0 0
    %54 = vmatprep.subr.bf16.mxu0 0
    %55 = vmatpush1.bf16.msra.mxu0 0
    %56 = vmatprep.subr.bf16.mxu0 0
    %57 = vmatpush1.bf16.msra.mxu0 0
    %58 = vmatprep.subr.bf16.mxu0 0
    %59 = vmatpush1.bf16.msra.mxu0 0
    %60 = vmatprep.subr.bf16.mxu0 0
    %61 = vmatpush1.bf16.msra.mxu0 0
    %62 = vmatprep.subr.bf16.mxu0 0
    %63 = vmatpush1.bf16.msra.mxu0 0
    %64 = vmatprep.subr.bf16.mxu0 0
    %65 = vmatpush1.bf16.msra.mxu0 %v44
    %66 = vmatprep.subr.bf16.mxu0 0
    %67 = vmatpush2.bf16.msra.mxu0 0
    %68 = vmatprep.subr.bf16.mxu0 0
    %69 = vmatpush2.bf16.msra.mxu0 0
    %70 = vmatprep.subr.bf16.mxu0 0
    %71 = vmatpush2.bf16.msra.mxu0 0
    %72 = vmatprep.subr.bf16.mxu0 0
    %73 = vmatpush2.bf16.msra.mxu0 0
    %74 = vmatprep.subr.bf16.mxu0 0
    %75 = vmatpush2.bf16.msra.mxu0 0
    %76 = vmatprep.subr.bf16.mxu0 0
    %77 = vmatpush2.bf16.msra.mxu0 0
    %78 = vmatprep.subr.bf16.mxu0 0
    %79 = vmatpush2.bf16.msra.mxu0 0
    %80 = vmatprep.subr.bf16.mxu0 0
    %81 = vmatpush2.bf16.msra.mxu0 0
    %82 = vmatprep.mubr.bf16.mxu0 0
    %83 = vmatmul.mubr.bf16.gmra.mxu0 %v48
    %v84 = vpop.f32.mrf.mxu0
    %v85 = vadd.f32 0.0, %v84
    %v86 = vpop.f32.mrf.mxu0
    %v87 = vpop.f32.mrf.mxu0
    %v88 = vadd.f32 0.0, %v87
    %v89 = vpop.f32.mrf.mxu0
    %90 = vdwg.mxu0
    %v91 = vpack.c.bf16 %v88, %v85
    %v92 = vld [vmem:[%s3] sm:$0xf]
    %v93 = vld [vmem:[%s3 + $0x4] sm:$0xf]
    %v94 = vld [vmem:[%s3 + $0x8] sm:$0xf]
    %v95 = vld [vmem:[%s3 + $0xc] sm:$0xf]
    %v96 = vld [vmem:[%s3 + $0x10] sm:$0xf]
    %v97 = vld [vmem:[%s3 + $0x14] sm:$0xf]
    %v98 = vld [vmem:[%s3 + $0x18] sm:$0xf]
    %v99 = vld [vmem:[%s3 + $0x1c] sm:$0xf]
    %v100 = vld [vmem:[%s3 + $0x20] sm:$0xf]
    %v101 = vld [vmem:[%s3 + $0x24] sm:$0xf]
    %v102 = vld [vmem:[%s3 + $0x28] sm:$0xf]
    %v103 = vld [vmem:[%s3 + $0x2c] sm:$0xf]
    %v104 = vld [vmem:[%s3 + $0x30] sm:$0xf]
    %v105 = vld [vmem:[%s3 + $0x34] sm:$0xf]
    %v106 = vld [vmem:[%s3 + $0x38] sm:$0xf]
    %v107 = vld [vmem:[%s3 + $0x3c] sm:$0xf]
    %v108 = vld [vmem:[%s4] sm:$0x1]
    %v110 = vlaneseq
    %v111 = vshrl.u32 %v110, 7
    %v112 = vsub.s32 0, %v111
    %v113 = vrot.slane %v108, %v112
    %v131 = vunpack.c.l.b16 %v92
    %v132 = vunpack.c.l.b16 %v93
    %v133 = vunpack.c.l.b16 %v94
    %v134 = vunpack.c.l.b16 %v95
    %v135 = vunpack.c.l.b16 %v96
    %v136 = vunpack.c.l.b16 %v97
    %v137 = vunpack.c.l.b16 %v98
    %v138 = vunpack.c.l.b16 %v99
    %v139 = vunpack.c.l.b16 %v100
    %v140 = vunpack.c.l.b16 %v101
    %v141 = vunpack.c.l.b16 %v102
    %v142 = vunpack.c.l.b16 %v103
    %v143 = vunpack.c.l.b16 %v104
    %v144 = vunpack.c.l.b16 %v105
    %v145 = vunpack.c.l.b16 %v106
    %v146 = vunpack.c.l.b16 %v107
    %v147 = vpack.c.b16 %v132, %v131
    %v148 = vpack.c.b16 %v134, %v133
    %v149 = vpack.c.b16 %v136, %v135
    %v150 = vpack.c.b16 %v138, %v137
    %v151 = vpack.c.b16 %v140, %v139
    %v152 = vpack.c.b16 %v142, %v141
    %v153 = vpack.c.b16 %v144, %v143
    %v154 = vpack.c.b16 %v146, %v145
    %163 = vmatprep.subr.bf16.mxu0 0
    %164 = vmatpush1.bf16.msra.mxu0 %v154
    %165 = vmatprep.subr.bf16.mxu0 0
    %166 = vmatpush1.bf16.msra.mxu0 %v153
    %167 = vmatprep.subr.bf16.mxu0 0
    %168 = vmatpush1.bf16.msra.mxu0 %v152
    %169 = vmatprep.subr.bf16.mxu0 0
    %170 = vmatpush1.bf16.msra.mxu0 %v151
    %171 = vmatprep.subr.bf16.mxu0 0
    %172 = vmatpush1.bf16.msra.mxu0 %v150
    %173 = vmatprep.subr.bf16.mxu0 0
    %174 = vmatpush1.bf16.msra.mxu0 %v149
    %175 = vmatprep.subr.bf16.mxu0 0
    %176 = vmatpush1.bf16.msra.mxu0 %v148
    %177 = vmatprep.subr.bf16.mxu0 0
    %178 = vmatpush1.bf16.msra.mxu0 %v147
    %179 = vmatprep.subr.bf16.mxu0 0
    %180 = vmatpush2.bf16.msra.mxu0 0
    %181 = vmatprep.subr.bf16.mxu0 0
    %182 = vmatpush2.bf16.msra.mxu0 0
    %183 = vmatprep.subr.bf16.mxu0 0
    %184 = vmatpush2.bf16.msra.mxu0 0
    %185 = vmatprep.subr.bf16.mxu0 0
    %186 = vmatpush2.bf16.msra.mxu0 0
    %187 = vmatprep.subr.bf16.mxu0 0
    %188 = vmatpush2.bf16.msra.mxu0 0
    %189 = vmatprep.subr.bf16.mxu0 0
    %190 = vmatpush2.bf16.msra.mxu0 0
    %191 = vmatprep.subr.bf16.mxu0 0
    %192 = vmatpush2.bf16.msra.mxu0 0
    %193 = vmatprep.subr.bf16.mxu0 0
    %194 = vmatpush2.bf16.msra.mxu0 0
    %195 = vmatprep.mubr.bf16.mxu0 0
    %196 = vmatmul.mubr.bf16.gmra.mxu0 %v91
    %v197 = vpop.f32.mrf.mxu0
    %v198 = vadd.f32 %v113, %v197
    %v199 = vpop.f32.mrf.mxu0
    %v200 = vpop.f32.mrf.mxu0
    %v201 = vadd.f32 %v113, %v200
    %v202 = vpop.f32.mrf.mxu0
    %203 = vdwg.mxu0
    %v204 = vmax.f32 %v198, 0.0
    %v205 = vmax.f32 %v201, 0.0
    %206 = vst [vmem:[#allocation2] sm:$0xff] %v204
    %207 = vst [vmem:[#allocation2 + $0x8] sm:$0xff] %v205
    %v208 = vld [vmem:[%s2] sm:$0xf]
    %v209 = vld [vmem:[%s2 + $0x4] sm:$0xf]
    %v210 = vld [vmem:[%s5] sm:$0xf]
    %v211 = vld [vmem:[%s5 + $0x4] sm:$0xf]
    %v212 = vld [vmem:[%s5 + $0x8] sm:$0xf]
    %v213 = vld [vmem:[%s5 + $0xc] sm:$0xf]
    %v214 = vld [vmem:[%s5 + $0x10] sm:$0xf]
    %v215 = vld [vmem:[%s5 + $0x14] sm:$0xf]
    %v216 = vld [vmem:[%s5 + $0x18] sm:$0xf]
    %v217 = vld [vmem:[%s5 + $0x1c] sm:$0xf]
    %v218 = vld [vmem:[%s5 + $0x20] sm:$0xf]
    %v219 = vld [vmem:[%s5 + $0x24] sm:$0xf]
    %v220 = vld [vmem:[%s5 + $0x28] sm:$0xf]
    %v221 = vld [vmem:[%s5 + $0x2c] sm:$0xf]
    %v222 = vld [vmem:[%s5 + $0x30] sm:$0xf]
    %v223 = vld [vmem:[%s5 + $0x34] sm:$0xf]
    %v224 = vld [vmem:[%s5 + $0x38] sm:$0xf]
    %v225 = vld [vmem:[%s5 + $0x3c] sm:$0xf]
    %v226 = vld [vmem:[%s6] sm:$0x1]
    %v228 = vlaneseq
    %v229 = vshrl.u32 %v228, 7
    %v230 = vsub.s32 0, %v229
    %v231 = vrot.slane %v226, %v230
    %v235 = vunpack.c.l.b16 %v208
    %v236 = vunpack.c.l.b16 %v209
    %v237 = vpack.c.b16 %v236, %v235
    %v255 = vunpack.c.l.b16 %v210
    %v256 = vunpack.c.l.b16 %v211
    %v257 = vunpack.c.l.b16 %v212
    %v258 = vunpack.c.l.b16 %v213
    %v259 = vunpack.c.l.b16 %v214
    %v260 = vunpack.c.l.b16 %v215
    %v261 = vunpack.c.l.b16 %v216
    %v262 = vunpack.c.l.b16 %v217
    %v263 = vunpack.c.l.b16 %v218
    %v264 = vunpack.c.l.b16 %v219
    %v265 = vunpack.c.l.b16 %v220
    %v266 = vunpack.c.l.b16 %v221
    %v267 = vunpack.c.l.b16 %v222
    %v268 = vunpack.c.l.b16 %v223
    %v269 = vunpack.c.l.b16 %v224
    %v270 = vunpack.c.l.b16 %v225
    %v271 = vpack.c.b16 %v256, %v255
    %v272 = vpack.c.b16 %v258, %v257
    %v273 = vpack.c.b16 %v260, %v259
    %v274 = vpack.c.b16 %v262, %v261
    %v275 = vpack.c.b16 %v264, %v263
    %v276 = vpack.c.b16 %v266, %v265
    %v277 = vpack.c.b16 %v268, %v267
    %v278 = vpack.c.b16 %v270, %v269
    %287 = vmatprep.subr.bf16.mxu0 0
    %288 = vmatpush1.bf16.msra.mxu0 %v278
    %289 = vmatprep.subr.bf16.mxu0 0
    %290 = vmatpush1.bf16.msra.mxu0 %v277
    %291 = vmatprep.subr.bf16.mxu0 0
    %292 = vmatpush1.bf16.msra.mxu0 %v276
    %293 = vmatprep.subr.bf16.mxu0 0
    %294 = vmatpush1.bf16.msra.mxu0 %v275
    %295 = vmatprep.subr.bf16.mxu0 0
    %296 = vmatpush1.bf16.msra.mxu0 %v274
    %297 = vmatprep.subr.bf16.mxu0 0
    %298 = vmatpush1.bf16.msra.mxu0 %v273
    %299 = vmatprep.subr.bf16.mxu0 0
    %300 = vmatpush1.bf16.msra.mxu0 %v272
    %301 = vmatprep.subr.bf16.mxu0 0
    %302 = vmatpush1.bf16.msra.mxu0 %v271
    %303 = vmatprep.subr.bf16.mxu0 0
    %304 = vmatpush2.bf16.msra.mxu0 0
    %305 = vmatprep.subr.bf16.mxu0 0
    %306 = vmatpush2.bf16.msra.mxu0 0
    %307 = vmatprep.subr.bf16.mxu0 0
    %308 = vmatpush2.bf16.msra.mxu0 0
    %309 = vmatprep.subr.bf16.mxu0 0
    %310 = vmatpush2.bf16.msra.mxu0 0
    %311 = vmatprep.subr.bf16.mxu0 0
    %312 = vmatpush2.bf16.msra.mxu0 0
    %313 = vmatprep.subr.bf16.mxu0 0
    %314 = vmatpush2.bf16.msra.mxu0 0
    %315 = vmatprep.subr.bf16.mxu0 0
    %316 = vmatpush2.bf16.msra.mxu0 0
    %317 = vmatprep.subr.bf16.mxu0 0
    %318 = vmatpush2.bf16.msra.mxu0 0
    %319 = vmatprep.mubr.bf16.mxu0 0
    %320 = vmatmul.mubr.bf16.gmra.mxu0 %v237
    %v321 = vpop.f32.mrf.mxu0
    %v322 = vadd.f32 %v231, %v321
    %v323 = vpop.f32.mrf.mxu0
    %v324 = vpop.f32.mrf.mxu0
    %v325 = vadd.f32 %v231, %v324
    %v326 = vpop.f32.mrf.mxu0
    %327 = vdwg.mxu0
    %v328 = vmax.f32 %v322, 0.0
    %v329 = vmax.f32 %v325, 0.0
    %330 = vst [vmem:[#allocation4] sm:$0xff] %v328
    %331 = vst [vmem:[#allocation4 + $0x8] sm:$0xff] %v329
    // Predicated region
    $region30: #{sdgnn_forward.1} parent=1 // pred_check
      _
    $region31: #{sdgnn_forward.1} parent=1 // pred_check_branch
      %333 = sbr.rel (0) target = $region33
    $region32: #{sdgnn_forward.1} parent=1 // pred_region
      %s335 = ssub.s32 256, 256
      %336 = vsyncadd [#allocation3], %s335
      %s337 = sshll.u32 [#allocation2], 4
      %s338 = int_to_ptr.vmem [resolvable:$true] %s337
      %343 = dma.vmem_to_hbm [thread:$0]  %s338, 256, %s7, [#allocation3], 128, 128, 8
    $region33: #{sdgnn_forward.1} parent=1 // pred_fallthru
      _
    // Predicated region
    $region34: #{sdgnn_forward.1} parent=1 // pred_check
      _
    $region35: #{sdgnn_forward.1} parent=1 // pred_check_branch
      %345 = sbr.rel (0) target = $region37
    $region36: #{sdgnn_forward.1} parent=1 // pred_region
      %s347 = ssub.s32 256, 256
      %348 = vsyncadd [#allocation5], %s347
      %s349 = sshll.u32 [#allocation4], 4
      %s350 = int_to_ptr.vmem [resolvable:$true] %s349
      %355 = dma.vmem_to_hbm [thread:$0]  %s350, 256, %s8, [#allocation5], 128, 128, 8
    $region37: #{sdgnn_forward.1} parent=1 // pred_fallthru
      _
    // Predicated region
    $region38: #{sdgnn_forward.1} parent=1 // pred_check
      _
    $region39: #{sdgnn_forward.1} parent=1 // pred_check_branch
      %357 = sbr.rel (0) target = $region41
    $region40: #{sdgnn_forward.1} parent=1 // pred_region
      %358 = dma.done [#allocation3], 256
    $region41: #{sdgnn_forward.1} parent=1 // pred_fallthru
      _
    // Predicated region
    $region42: #{sdgnn_forward.1} parent=1 // pred_check
      _
    $region43: #{sdgnn_forward.1} parent=1 // pred_check_branch
      %360 = sbr.rel (0) target = $region45
    $region44: #{sdgnn_forward.1} parent=1 // pred_region
      %361 = dma.done [#allocation5], 256
    $region45: #{sdgnn_forward.1} parent=1 // pred_fallthru
      _
    %362 = vsyncpa [#allocation3], 1
    %363 = vsyncpa [#allocation5], 1

</llo_original>
